<compile_context>
chip_gen: v7x
topology: tpu7x:2x2x1
jax: 0.10.0
libtpu: 0.0.40
codegen_flags: <defaults>
</compile_context>

<pallas_src>
import functools

import jax
import jax.numpy as jnp
from jax.experimental import pallas as pl
from jax.experimental.pallas import tpu as pltpu


LANE = 128          # vreg lane width; flattened data is laid out (rows, 128)
ROW_ALIGN = 16      # sublane alignment covering f32 (8,128) and bf16 (16,128)
CHUNK_R = 512       # rows per inner accumulation step (keeps temps vreg/VMEM-small)
TILE_R_MAX = 8192   # rows/tile: 8192*128*4B = 4 MiB per f32 input per buffer
                    # -> 2 inputs * 2 pipeline buffers * 4 MiB = 16 MiB VMEM


def _round_up(x, m):
    return (x + m - 1) // m * m


def _num_tensorcores():
    """2 TensorCores per chip on v7x, 1 on v5e/v6e (split only helps v7x)."""
    try:
        kind = jax.devices()[0].device_kind.lower()
    except Exception:
        return 1
    return 2 if "v7" in kind else 1


def _yaml_loss_kernel(scale_ref, nvalid_ref, x_ref, y_ref, o_ref, *,
                      tile_r, chunk_r, grid_r, nsplit):
    """Streaming sum-of-squared-error reduction.

    Grid is (grid_r,) on 1-TC chips or (nsplit, grid_r) on v7x; the last axis
    is the streaming/reduction axis.

    scale_ref : SMEM (1,) f32  fused scale = (weight or weight/bsz) / n_elems.
    nvalid_ref: SMEM (1,) i32  number of valid (un-padded) elements.
    x_ref, y_ref: VMEM (tile_r, LANE) tiles of pred / target (input dtype).
    o_ref     : VMEM (8, LANE) f32 per-split partial accumulator (output
                block, revisited across the reduction axis).
    """
    if nsplit > 1:
        p = pl.program_id(0)
        i = pl.program_id(1)
        red_axis = 1
    else:
        p = 0
        i = pl.program_id(0)
        red_axis = 0

    @pl.when(i == 0)
    def _init():
        o_ref[...] = jnp.zeros_like(o_ref)

    n_valid = nvalid_ref[0]
    # Logical (unclamped) block index -> first global element of this tile.
    block_idx = p * grid_r + i
    tile_start = block_idx * (tile_r * LANE)
    tile_end = tile_start + tile_r * LANE

    def accumulate(masked):
        n_chunks = tile_r // chunk_r

        def body(j, acc):
            r0 = pl.multiple_of(j * chunk_r, chunk_r)
            xc = x_ref[pl.ds(r0, chunk_r), :].astype(jnp.float32)
            yc = y_ref[pl.ds(r0, chunk_r), :].astype(jnp.float32)
            d = xc - yc
            sq = d * d
            if masked:
                # Mask by global element index: covers the ragged row tail,
                # the <128-element flat pad, and any garbage from the DMA
                # overhang of the final partial block.
                row_ids = jax.lax.broadcasted_iota(jnp.int32, (chunk_r, LANE), 0)
                lane_ids = jax.lax.broadcasted_iota(jnp.int32, (chunk_r, LANE), 1)
                elem = tile_start + (r0 + row_ids) * LANE + lane_ids
                sq = jnp.where(elem < n_valid, sq, 0.0)
            # Reduce only over the sublane-group axis (pure VPU adds); the
            # final cross-lane/sublane reduce happens once, in the wrapper.
            return acc + jnp.sum(sq.reshape(chunk_r // 8, 8, LANE), axis=0)

        acc = jax.lax.fori_loop(0, n_chunks, body,
                                jnp.zeros((8, LANE), jnp.float32),
                                unroll=True)
        o_ref[...] += acc

    is_full = tile_end <= n_valid

    @pl.when(is_full)
    def _full_tile():
        accumulate(masked=False)

    @pl.when(jnp.logical_not(is_full))
    def _partial_tile():
        accumulate(masked=True)

    @pl.when(i == pl.num_programs(red_axis) - 1)
    def _finalize():
        o_ref[...] = o_ref[...] * scale_ref[0]


def yaml_loss_forward(input_dict, input_keys, weight=1.0, batch_norm=False):
    """Mirror of YamlLoss.forward:
        bsz = input_dict[input_keys[0]].shape[0]
        w   = weight / bsz if batch_norm else weight
        return w * loss(*[input_dict[k] for k in input_keys])
    with loss(...) == MSE(pred, target) computed by the Pallas kernel.
    """
    # TODO(synk): YamlLoss.loss is abstract in the reference module; a
    # representative elementwise MSE is used as the concrete reduction.
    args = [input_dict[k] for k in input_keys]
    x, y = args[0], args[1]
    assert x.shape == y.shape, (x.shape, y.shape)
    bsz = x.shape[0]
    w = (weight / bsz) if batch_norm else weight

    n_elems = x.size
    # Fused scale uses the GLOBAL element count (never the tile-local shape).
    scale = jnp.asarray([w / n_elems], dtype=jnp.float32)
    # TODO(synk): int32 element indexing caps n_elems at ~2.1e9 elements.
    n_valid = jnp.asarray([n_elems], dtype=jnp.int32)

    # Free reshape to a lane-dense (rows, 128) layout.  No jnp.pad in the
    # common LANE-aligned case; otherwise a minimal (<128 element) tail pad
    # makes the reshape legal, and those elements are masked out in-kernel.
    flat_x = x.reshape(-1)
    flat_y = y.reshape(-1)
    rem = n_elems % LANE
    if rem:
        # TODO(synk): this minimal pad still materializes one copy for ragged
        # sizes; CompilerParams(allow_input_fusion=...) could fold it into DMA.
        pad = LANE - rem
        flat_x = jnp.pad(flat_x, (0, pad))
        flat_y = jnp.pad(flat_y, (0, pad))
    rows = flat_x.size // LANE
    x2 = flat_x.reshape(rows, LANE)
    y2 = flat_y.reshape(rows, LANE)

    # --- static tiling geometry ---
    if rows > CHUNK_R:
        tile_r = min(TILE_R_MAX, _round_up(rows, CHUNK_R))
        chunk_r = CHUNK_R
    else:
        tile_r = _round_up(rows, ROW_ALIGN)
        chunk_r = tile_r
    nblocks = -(-rows // tile_r)
    last_block = nblocks - 1

    nsplit = _num_tensorcores()
    if nsplit < 2 or nblocks < 2 * nsplit:
        nsplit = 1                      # not worth splitting / 1-TC chip
    grid_r = -(-nblocks // nsplit)

    kernel = functools.partial(_yaml_loss_kernel, tile_r=tile_r,
                               chunk_r=chunk_r, grid_r=grid_r, nsplit=nsplit)

    smem_spec = pl.BlockSpec(memory_space=pltpu.MemorySpace.SMEM)
    if nsplit == 1:
        grid = (grid_r,)
        data_spec = pl.BlockSpec((tile_r, LANE), lambda i: (i, 0))
        out_spec = pl.BlockSpec((8, LANE), lambda i: (0, 0))
        dims = ("arbitrary",)
    else:
        grid = (nsplit, grid_r)

        def data_map(p, i):
            # Clamp so any fully out-of-range step (uneven split) just
            # re-reads the last block; its contribution is masked to zero.
            return (jnp.minimum(p * grid_r + i, last_block), 0)

        data_spec = pl.BlockSpec((tile_r, LANE), data_map)
        out_spec = pl.BlockSpec((8, LANE), lambda p, i: (p, 0))
        core_par = getattr(pltpu, "CORE_PARALLEL", None)
        dims = ((core_par, pltpu.ARBITRARY) if core_par is not None
                else ("parallel", "arbitrary"))

    out = pl.pallas_call(
        kernel,
        out_shape=jax.ShapeDtypeStruct((nsplit * 8, LANE), jnp.float32),
        grid_spec=pltpu.PrefetchScalarGridSpec(
            num_scalar_prefetch=0,
            grid=grid,
            in_specs=[smem_spec, smem_spec, data_spec, data_spec],
            out_specs=out_spec,
        ),
        compiler_params=pltpu.CompilerParams(
            dimension_semantics=dims,
            vmem_limit_bytes=32 * 1024 * 1024,
        ),
    )(scale, n_valid, x2, y2)

    # Sum the per-split (already scaled) (8,128) partial accumulators.
    return jnp.sum(out)


if __name__ == "__main__":
    key = jax.random.PRNGKey(0)
    k1, k2, k3, k4 = jax.random.split(key, 4)

    B, C, H, W = 2, 4, 16, 16
    pred = jax.random.normal(k1, (B, C, H, W), dtype=jnp.float32)
    target = jax.random.normal(k2, (B, C, H, W), dtype=jnp.float32)
    input_dict = {"pred": pred, "target": target}
    weight = 0.5

    def ref(p, t, w, bn):
        bsz = p.shape[0]
        ww = w / bsz if bn else w
        return ww * jnp.mean(
            (p.astype(jnp.float32) - t.astype(jnp.float32)) ** 2)

    # batch_norm = False path
    out_plain = jax.block_until_ready(
        yaml_loss_forward(input_dict, ("pred", "target"),
                          weight=weight, batch_norm=False))
    # batch_norm = True path (weight / bsz)
    out_bn = jax.block_until_ready(
        yaml_loss_forward(input_dict, ("pred", "target"),
                          weight=weight, batch_norm=True))

    assert jnp.allclose(out_plain, ref(pred, target, weight, False),
                        rtol=1e-5, atol=1e-6), (out_plain,
                                                ref(pred, target, weight, False))
    assert jnp.allclose(out_bn, ref(pred, target, weight, True),
                        rtol=1e-5, atol=1e-6), (out_bn,
                                                ref(pred, target, weight, True))

    # bf16 inputs pass through as bf16 (half the HBM bytes), accumulate in f32.
    pred_bf = pred.astype(jnp.bfloat16)
    target_bf = target.astype(jnp.bfloat16)
    out_bf = jax.block_until_ready(
        yaml_loss_forward({"pred": pred_bf, "target": target_bf},
                          ("pred", "target"), weight=weight, batch_norm=False))
    assert jnp.allclose(out_bf, ref(pred_bf, target_bf, weight, False),
                        rtol=1e-4, atol=1e-5), out_bf

    # Shape not a multiple of 128 exercises the in-kernel masking path.
    xo = jax.random.normal(k3, (3, 5, 7, 11), dtype=jnp.float32)
    yo = jax.random.normal(k4, (3, 5, 7, 11), dtype=jnp.float32)
    out_odd = jax.block_until_ready(
        yaml_loss_forward({"a": xo, "b": yo}, ("a", "b"),
                          weight=1.25, batch_norm=True))
    assert jnp.allclose(out_odd, ref(xo, yo, 1.25, True),
                        rtol=1e-5, atol=1e-6), out_odd

    print("KERNEL_OK")
</pallas_src>

<mosaic_0001>
module attributes {stable_mosaic.version = 11 : i64} {
  func.func @_yaml_loss_kernel(%arg0: i32, %arg1: memref<1xf32, #tpu.memory_space<smem>>, %arg2: memref<1xi32, #tpu.memory_space<smem>>, %arg3: memref<16x128xf32, #tpu.memory_space<vmem>>, %arg4: memref<16x128xf32, #tpu.memory_space<vmem>>, %arg5: memref<8x128xf32, #tpu.memory_space<vmem>>) attributes {dimension_semantics = [#tpu.dimension_semantics<arbitrary>], iteration_bounds = array<i64: 1>, scalar_prefetch = 0 : i64, scratch_operands = 0 : i64, tpu.core_type = #tpu.core_type<tc>, window_params = [{transform_indices = @transform_0, window_bounds = array<i64: 1>}, {transform_indices = @transform_1, window_bounds = array<i64: 1>}, {transform_indices = @transform_2, window_bounds = array<i64: 16, 128>}, {transform_indices = @transform_3, window_bounds = array<i64: 16, 128>}, {pipeline_mode = #tpu.pipeline_mode<synchronous>, transform_indices = @transform_4, window_bounds = array<i64: 8, 128>}]} {
    %c0_i32 = arith.constant 0 : i32
    %0 = arith.cmpi eq, %arg0, %c0_i32 : i32
    %1 = arith.extui %0 : i1 to i32
    %c0_i32_0 = arith.constant 0 : i32
    %2 = arith.cmpi ne, %1, %c0_i32_0 : i32
    scf.if %2 {
      %cst = arith.constant 0.000000e+00 : f32
      %16 = vector.broadcast %cst : f32 to vector<8x128xf32>
      %c0_7 = arith.constant 0 : index
      %c0_8 = arith.constant 0 : index
      %17 = vector.load %arg5[%c0_7, %c0_8] : memref<8x128xf32, #tpu.memory_space<vmem>>, vector<8x128xf32>
      tpu.vector_store %arg5[%c0_7, %c0_8], %16 {strides = array<i32>} : memref<8x128xf32, #tpu.memory_space<vmem>>, vector<8x128xf32>,
    } else {
    }
    %c0 = arith.constant 0 : index
    %3 = memref.load %arg2[%c0] : memref<1xi32, #tpu.memory_space<smem>>
    %c0_i32_1 = arith.constant 0 : i32
    %4 = arith.addi %c0_i32_1, %arg0 : i32
    %c2048_i32 = arith.constant 2048 : i32
    %5 = arith.muli %4, %c2048_i32 : i32
    %c2048_i32_2 = arith.constant 2048 : i32
    %6 = arith.addi %5, %c2048_i32_2 : i32
    %7 = arith.cmpi sle, %6, %3 : i32
    %8 = arith.extui %7 : i1 to i32
    %c0_i32_3 = arith.constant 0 : i32
    %9 = arith.cmpi ne, %8, %c0_i32_3 : i32
    scf.if %9 {
      %cst = arith.constant 0.000000e+00 : f32
      %16 = vector.broadcast %cst : f32 to vector<8x128xf32>
      %c0_i32_7 = arith.constant 0 : i32
      %c16_i32 = arith.constant 16 : i32
      %17 = arith.muli %c0_i32_7, %c16_i32 : i32
      %18 = tpu.assume_multiple %17, 16 : i32
      %19 = arith.index_cast %18 : i32 to index
      %c0_8 = arith.constant 0 : index
      %20 = vector.load %arg3[%19, %c0_8] : memref<16x128xf32, #tpu.memory_space<vmem>>, vector<16x128xf32>
      %21 = arith.index_cast %18 : i32 to index
      %c0_9 = arith.constant 0 : index
      %22 = vector.load %arg4[%21, %c0_9] : memref<16x128xf32, #tpu.memory_space<vmem>>, vector<16x128xf32>
      %23 = arith.subf %20, %22 : vector<16x128xf32>
      %24 = arith.mulf %23, %23 : vector<16x128xf32>
      %25 = vector.shape_cast %24 : vector<16x128xf32> to vector<2x8x128xf32>
      %cst_10 = arith.constant dense<0.000000e+00> : vector<8x128xf32>
      %26 = vector.multi_reduction <add>, %25, %cst_10 [0] : vector<2x8x128xf32> to vector<8x128xf32>
      %27 = arith.addf %16, %26 : vector<8x128xf32>
      %c1_i32 = arith.constant 1 : i32
      %c0_11 = arith.constant 0 : index
      %c0_12 = arith.constant 0 : index
      %28 = vector.load %arg5[%c0_11, %c0_12] : memref<8x128xf32, #tpu.memory_space<vmem>>, vector<8x128xf32>
      %29 = arith.addf %28, %27 : vector<8x128xf32>
      %c0_13 = arith.constant 0 : index
      %c0_14 = arith.constant 0 : index
      %30 = vector.load %arg5[%c0_13, %c0_14] : memref<8x128xf32, #tpu.memory_space<vmem>>, vector<8x128xf32>
      tpu.vector_store %arg5[%c0_13, %c0_14], %29 {strides = array<i32>} : memref<8x128xf32, #tpu.memory_space<vmem>>, vector<8x128xf32>,
    } else {
    }
    %true = arith.constant true
    %10 = arith.xori %7, %true : i1
    %11 = arith.extui %10 : i1 to i32
    %c0_i32_4 = arith.constant 0 : i32
    %12 = arith.cmpi ne, %11, %c0_i32_4 : i32
    scf.if %12 {
      %cst = arith.constant 0.000000e+00 : f32
      %16 = vector.broadcast %cst : f32 to vector<8x128xf32>
      %c0_i32_7 = arith.constant 0 : i32
      %c16_i32 = arith.constant 16 : i32
      %17 = arith.muli %c0_i32_7, %c16_i32 : i32
      %18 = tpu.assume_multiple %17, 16 : i32
      %19 = arith.index_cast %18 : i32 to index
      %c0_8 = arith.constant 0 : index
      %20 = vector.load %arg3[%19, %c0_8] : memref<16x128xf32, #tpu.memory_space<vmem>>, vector<16x128xf32>
      %21 = arith.index_cast %18 : i32 to index
      %c0_9 = arith.constant 0 : index
      %22 = vector.load %arg4[%21, %c0_9] : memref<16x128xf32, #tpu.memory_space<vmem>>, vector<16x128xf32>
      %23 = arith.subf %20, %22 : vector<16x128xf32>
      %24 = arith.mulf %23, %23 : vector<16x128xf32>
      %25 = tpu.iota {dimensions = array<i32: 0>} : vector<16x128xi32>
      %26 = tpu.iota {dimensions = array<i32: 1>} : vector<16x128xi32>
      %27 = vector.broadcast %18 : i32 to vector<16x128xi32>
      %28 = arith.addi %27, %25 : vector<16x128xi32>
      %c128_i32 = arith.constant 128 : i32
      %29 = vector.broadcast %c128_i32 : i32 to vector<16x128xi32>
      %30 = arith.muli %28, %29 : vector<16x128xi32>
      %31 = vector.broadcast %5 : i32 to vector<16x128xi32>
      %32 = arith.addi %31, %30 : vector<16x128xi32>
      %33 = arith.addi %32, %26 : vector<16x128xi32>
      %34 = vector.broadcast %3 : i32 to vector<16x128xi32>
      %35 = arith.cmpi slt, %33, %34 : vector<16x128xi32>
      %cst_10 = arith.constant 0.000000e+00 : f32
      %36 = vector.broadcast %cst_10 : f32 to vector<16x128xf32>
      %37 = arith.select %35, %24, %36 : vector<16x128xi1>, vector<16x128xf32>
      %38 = vector.shape_cast %37 : vector<16x128xf32> to vector<2x8x128xf32>
      %cst_11 = arith.constant dense<0.000000e+00> : vector<8x128xf32>
      %39 = vector.multi_reduction <add>, %38, %cst_11 [0] : vector<2x8x128xf32> to vector<8x128xf32>
      %40 = arith.addf %16, %39 : vector<8x128xf32>
      %c1_i32 = arith.constant 1 : i32
      %c0_12 = arith.constant 0 : index
      %c0_13 = arith.constant 0 : index
      %41 = vector.load %arg5[%c0_12, %c0_13] : memref<8x128xf32, #tpu.memory_space<vmem>>, vector<8x128xf32>
      %42 = arith.addf %41, %40 : vector<8x128xf32>
      %c0_14 = arith.constant 0 : index
      %c0_15 = arith.constant 0 : index
      %43 = vector.load %arg5[%c0_14, %c0_15] : memref<8x128xf32, #tpu.memory_space<vmem>>, vector<8x128xf32>
      tpu.vector_store %arg5[%c0_14, %c0_15], %42 {strides = array<i32>} : memref<8x128xf32, #tpu.memory_space<vmem>>, vector<8x128xf32>,
    } else {
    }
    %c0_i32_5 = arith.constant 0 : i32
    %13 = arith.cmpi eq, %arg0, %c0_i32_5 : i32
    %14 = arith.extui %13 : i1 to i32
    %c0_i32_6 = arith.constant 0 : i32
    %15 = arith.cmpi ne, %14, %c0_i32_6 : i32
    scf.if %15 {
      %c0_7 = arith.constant 0 : index
      %c0_8 = arith.constant 0 : index
      %16 = vector.load %arg5[%c0_7, %c0_8] : memref<8x128xf32, #tpu.memory_space<vmem>>, vector<8x128xf32>
      %c0_9 = arith.constant 0 : index
      %17 = memref.load %arg1[%c0_9] : memref<1xf32, #tpu.memory_space<smem>>
      %18 = vector.broadcast %17 : f32 to vector<8x128xf32>
      %19 = arith.mulf %16, %18 : vector<8x128xf32>
      %c0_10 = arith.constant 0 : index
      %c0_11 = arith.constant 0 : index
      %20 = vector.load %arg5[%c0_10, %c0_11] : memref<8x128xf32, #tpu.memory_space<vmem>>, vector<8x128xf32>
      tpu.vector_store %arg5[%c0_10, %c0_11], %19 {strides = array<i32>} : memref<8x128xf32, #tpu.memory_space<vmem>>, vector<8x128xf32>,
    } else {
    }
    return
  }
  func.func @transform_0(%arg0: i32) -> i32 {
    %c0_i32 = arith.constant 0 : i32
    %c0_i32_0 = arith.constant 0 : i32
    return %c0_i32 : i32
  }
  func.func @transform_1(%arg0: i32) -> i32 {
    %c0_i32 = arith.constant 0 : i32
    %c0_i32_0 = arith.constant 0 : i32
    return %c0_i32 : i32
  }
  func.func @transform_2(%arg0: i32) -> (i32, i32) {
    %c0_i32 = arith.constant 0 : i32
    %c0_i32_0 = arith.constant 0 : i32
    return %arg0, %c0_i32 : i32, i32
  }
  func.func @transform_3(%arg0: i32) -> (i32, i32) {
    %c0_i32 = arith.constant 0 : i32
    %c0_i32_0 = arith.constant 0 : i32
    return %arg0, %c0_i32 : i32, i32
  }
  func.func @transform_4(%arg0: i32) -> (i32, i32) {
    %c0_i32 = arith.constant 0 : i32
    %c0_i32_0 = arith.constant 0 : i32
    %c0_i32_1 = arith.constant 0 : i32
    return %c0_i32, %c0_i32_0 : i32, i32
  }
}

</mosaic_0001>

<llo_original>
// kernel: tpu_custom_call.1
$region0: #{tpu_custom_call.1}
  #allocation0 [shape = 'u32[]', space=smem, size = 0x4, offset = 0x4, fixed_abs, tag = 'smem constant byte address 0x4 - core index']
  #allocation1 [shape = 'u32[144,128]{1,0:T(1,128)}', space=vmem, size = 0x12000, scoped, tag = 'internal scratch']
  #allocation2 [shape = 'f32[1]{0:T(128)S(6)}', space=smem, size = 0x200, scoped, tag = 'scoped memory for tpu_custom_call.1']
  #allocation3 [shape = 's32[1]{0:T(128)S(6)}', space=smem, size = 0x200, scoped, tag = 'scoped memory for tpu_custom_call.1']
  %s0 = inlined_call_operand.<no memory space> [shape: f32[1], index: 0, kind: input, shape index: {}]
  %s1 = inlined_call_operand.<no memory space> [shape: s32[1], index: 1, kind: input, shape index: {}]
  %s2 = inlined_call_operand.hbm [shape: f32[16,128], index: 2, kind: input, shape index: {}]
  %s3 = inlined_call_operand.hbm [shape: f32[16,128], index: 3, kind: input, shape index: {}]
  %s4 = inlined_call_operand.hbm [shape: f32[8,128], index: 4, kind: output, shape index: {}]
  %s5 = sld [smem:[#allocation0]]
  $region50: #{tpu_custom_call.1} parent=0
    _
  %s7 = ssub.s32 1, %s5
  %s8 = scalar_select 0, %s7, %s5
  %9 = sst [smem:[#allocation2]] %s0
  %10 = sst [smem:[#allocation3]] %s1
  $region1: #{tpu_custom_call.1} parent=0
    #allocation4 [shape = 'u8[8192]{0}', space=vmem, size = 0x2000, scoped, tag = 'input window, operand 2, single buffered']
    #allocation5 [shape = 's32[1]{0}', space=sflag, size = 0x4, scoped, tag = 'scoped memory for tpu_custom_call.1']
    #allocation6 [shape = 's32[1]{0}', space=sflag, size = 0x4, scoped, tag = 'scoped memory for tpu_custom_call.1']
    #allocation7 [shape = 'u8[8192]{0}', space=vmem, size = 0x2000, scoped, tag = 'input window, operand 3, single buffered']
    #allocation8 [shape = 's32[1]{0}', space=sflag, size = 0x4, scoped, tag = 'scoped memory for tpu_custom_call.1']
    #allocation9 [shape = 'u8[4096]{0}', space=vmem, size = 0x1000, scoped, tag = 'output window, operand 0, single buffered']
    %11 = vsyncpa [#allocation5], 0
    %12 = vsyncpa [#allocation8], 0
    %13 = vsyncpa [#allocation6], 0
    // Predicated region
    $region2: #{tpu_custom_call.1} parent=1 // pred_check
      _
    $region3: #{tpu_custom_call.1} parent=1 // pred_check_branch
      %15 = sbr.rel (0) target = $region5
    $region4: #{tpu_custom_call.1} parent=1 // pred_region
      _
    $region5: #{tpu_custom_call.1} parent=1 // pred_fallthru
      _
    // Predicated region
    $region6: #{tpu_custom_call.1} parent=1 // pred_check
      _
    $region7: #{tpu_custom_call.1} parent=1 // pred_check_branch
      %17 = sbr.rel (0) target = $region9
    $region8: #{tpu_custom_call.1} parent=1 // pred_region
      _
    $region9: #{tpu_custom_call.1} parent=1 // pred_fallthru
      _
    // Predicated region
    $region10: #{tpu_custom_call.1} parent=1 // pred_check
      _
    $region11: #{tpu_custom_call.1} parent=1 // pred_check_branch
      %19 = sbr.rel (0) target = $region13
    $region12: #{tpu_custom_call.1} parent=1 // pred_region
      %s21 = ssub.s32 256, 256
      %22 = vsyncadd [#allocation5], %s21
      %s23 = sshll.u32 [#allocation4], 4
      %s24 = int_to_ptr.vmem [resolvable:$true] %s23
      %29 = dma.hbm_to_vmem [thread:$0]  %s2, 256, %s24, [#allocation5], 128, 128, 8
    $region13: #{tpu_custom_call.1} parent=1 // pred_fallthru
      _
    // Predicated region
    $region14: #{tpu_custom_call.1} parent=1 // pred_check
      _
    $region15: #{tpu_custom_call.1} parent=1 // pred_check_branch
      %31 = sbr.rel (0) target = $region17
    $region16: #{tpu_custom_call.1} parent=1 // pred_region
      %s33 = ssub.s32 256, 256
      %34 = vsyncadd [#allocation8], %s33
      %s35 = sshll.u32 [#allocation7], 4
      %s36 = int_to_ptr.vmem [resolvable:$true] %s35
      %41 = dma.hbm_to_vmem [thread:$0]  %s3, 256, %s36, [#allocation8], 128, 128, 8
    $region17: #{tpu_custom_call.1} parent=1 // pred_fallthru
      _
    // Predicated region
    $region18: #{tpu_custom_call.1} parent=1 // pred_check
      _
    $region19: #{tpu_custom_call.1} parent=1 // pred_check_branch
      %43 = sbr.rel (0) target = $region21
    $region20: #{tpu_custom_call.1} parent=1 // pred_region
      %44 = dma.done [#allocation5], 256
    $region21: #{tpu_custom_call.1} parent=1 // pred_fallthru
      _
    // Predicated region
    $region22: #{tpu_custom_call.1} parent=1 // pred_check
      _
    $region23: #{tpu_custom_call.1} parent=1 // pred_check_branch
      %46 = sbr.rel (0) target = $region25
    $region24: #{tpu_custom_call.1} parent=1 // pred_region
      %47 = dma.done [#allocation8], 256
    $region25: #{tpu_custom_call.1} parent=1 // pred_fallthru
      _
    %p48 = scmp.eq.s32.totalorder 0, 0
    // Predicated region
    $region26: #{tpu_custom_call.1} parent=1 // pred_check
      %p49 = pneg %p48
    $region27: #{tpu_custom_call.1} parent=1 // pred_check_branch
      %51 = sbr.rel (%p49) target = $region29
    $region28: #{tpu_custom_call.1} parent=1 // pred_region
      %52 = vst [vmem:[#allocation9] sm:$0xff] 0.0
    $region29: #{tpu_custom_call.1} parent=1 // pred_fallthru
      _
    %s53 = sld [smem:[#allocation3]]
    %s54 = smul.u32 0, 2048
    %s55 = sadd.s32 %s54, 2048
    %p56 = scmp.le.s32.totalorder %s55, %s53
    // Predicated region
    $region30: #{tpu_custom_call.1} parent=1 // pred_check
      %p57 = pneg %p56
    $region31: #{tpu_custom_call.1} parent=1 // pred_check_branch
      %59 = sbr.rel (%p57) target = $region33
    $region32: #{tpu_custom_call.1} parent=1 // pred_region
      %v60 = vld [vmem:[#allocation4] sm:$0xff]
      %v61 = vld [vmem:[#allocation4 + $0x8] sm:$0xff]
      %v62 = vld [vmem:[#allocation7] sm:$0xff]
      %v63 = vld [vmem:[#allocation7 + $0x8] sm:$0xff]
      %v64 = vsub.f32 %v60, %v62
      %v65 = vsub.f32 %v61, %v63
      %v66 = vmul.f32 %v64, %v64
      %v67 = vmul.f32 %v65, %v65
      %v68 = vadd.f32 %v66, %v67
      %v69 = vadd.f32 %v68, 0.0
      %v70 = vld [vmem:[#allocation9] sm:$0xff]
      %v71 = vadd.f32 %v70, %v69
      %72 = vst [vmem:[#allocation9] sm:$0xff] %v71
    $region33: #{tpu_custom_call.1} parent=1 // pred_fallthru
      _
    %p73 = scmp.gt.s32.totalorder %s55, %s53
    // Predicated region
    $region34: #{tpu_custom_call.1} parent=1 // pred_check
      %p74 = pneg %p73
    $region35: #{tpu_custom_call.1} parent=1 // pred_check_branch
      %76 = sbr.rel (%p74) target = $region37
    $region36: #{tpu_custom_call.1} parent=1 // pred_region
      %v77 = vld [vmem:[#allocation4] sm:$0xff]
      %v78 = vld [vmem:[#allocation4 + $0x8] sm:$0xff]
      %v79 = vld [vmem:[#allocation7] sm:$0xff]
      %v80 = vld [vmem:[#allocation7 + $0x8] sm:$0xff]
      %v81 = vsub.f32 %v77, %v79
      %v82 = vsub.f32 %v78, %v80
      %v83 = vmul.f32 %v81, %v81
      %v84 = vmul.f32 %v82, %v82
      %v85 = vlaneseq
      %v86 = vshrl.u32 %v85, 7
      %v87 = vadd.s32 %v86, 8
      %v88 = vlaneseq
      %v89 = vand.u32 %v88, 127
      %v90 = vstv 0
      %v91 = vadd.s32 %v90, %v86
      %v92 = vadd.s32 %v90, %v87
      %v93 = vmul.u32 %v91, 128
      %v94 = vmul.u32 %v92, 128
      %v95 = vstv %s54
      %v96 = vadd.s32 %v95, %v93
      %v97 = vadd.s32 %v95, %v94
      %v98 = vadd.s32 %v96, %v89
      %v99 = vadd.s32 %v97, %v89
      %v100 = vstv %s53
      %vm101 = vcmp.lt.s32.totalorder %v98, %v100
      %vm102 = vcmp.lt.s32.totalorder %v99, %v100
      %v103 = vsel %vm101, %v83, 0.0
      %v104 = vsel %vm102, %v84, 0.0
      %v105 = vadd.f32 %v103, %v104
      %v106 = vadd.f32 %v105, 0.0
      %v107 = vld [vmem:[#allocation9] sm:$0xff]
      %v108 = vadd.f32 %v107, %v106
      %109 = vst [vmem:[#allocation9] sm:$0xff] %v108
    $region37: #{tpu_custom_call.1} parent=1 // pred_fallthru
      _
    // Predicated region
    $region38: #{tpu_custom_call.1} parent=1 // pred_check
      %p110 = pneg %p48
    $region39: #{tpu_custom_call.1} parent=1 // pred_check_branch
      %112 = sbr.rel (%p110) target = $region41
    $region40: #{tpu_custom_call.1} parent=1 // pred_region
      %v113 = vld [vmem:[#allocation9] sm:$0xff]
      %s114 = sld [smem:[#allocation2]]
      %v115 = vstv %s114
      %v116 = vmul.f32 %v113, %v115
      %117 = vst [vmem:[#allocation9] sm:$0xff] %v116
    $region41: #{tpu_custom_call.1} parent=1 // pred_fallthru
      _
    // Predicated region
    $region42: #{tpu_custom_call.1} parent=1 // pred_check
      _
    $region43: #{tpu_custom_call.1} parent=1 // pred_check_branch
      %119 = sbr.rel (0) target = $region45
    $region44: #{tpu_custom_call.1} parent=1 // pred_region
      %s121 = ssub.s32 128, 128
      %122 = vsyncadd [#allocation6], %s121
      %s124 = sshll.u32 [#allocation9], 4
      %s125 = int_to_ptr.vmem [resolvable:$true] %s124
      %127 = dma.vmem_to_hbm [thread:$0]  %s125, 128, %s4, [#allocation6]
    $region45: #{tpu_custom_call.1} parent=1 // pred_fallthru
      _
    // Predicated region
    $region46: #{tpu_custom_call.1} parent=1 // pred_check
      _
    $region47: #{tpu_custom_call.1} parent=1 // pred_check_branch
      %129 = sbr.rel (0) target = $region49
    $region48: #{tpu_custom_call.1} parent=1 // pred_region
      %130 = dma.done [#allocation6], 128
    $region49: #{tpu_custom_call.1} parent=1 // pred_fallthru
      _
    %131 = vsyncpa [#allocation5], 1
    %132 = vsyncpa [#allocation8], 1
    %133 = vsyncpa [#allocation6], 1

</llo_original>
